<compile_context>
chip_gen: v6e
topology: v6e:2x2x1
jax: 0.10.0
libtpu: 0.0.40
codegen_flags: <defaults>
</compile_context>

<pallas_src>
import functools

import jax
import jax.numpy as jnp
from jax import lax
from jax.experimental import pallas as pl
from jax.experimental.pallas import tpu as pltpu


def _round_up(x: int, m: int) -> int:
    return ((x + m - 1) // m) * m


def _sublanes_for(dtype) -> int:
    """Native sublane packing: 8 for 4-byte, 16 for 2-byte, 32 for 1-byte dtypes."""
    return {4: 8, 2: 16, 1: 32}.get(jnp.dtype(dtype).itemsize, 8)


def _largest_divisor_leq(total: int, limit: int) -> int:
    limit = max(1, min(total, limit))
    for d in range(limit, 0, -1):
        if total % d == 0:
            return d
    return 1


def _integrality_kernel(x_ref, out_ref, *, num_rows, tile_rows, need_mask):
    """x_ref: (bt, tm, N) input tile; out_ref: (1, bt, 128) per-batch sumsq accumulator."""
    i = pl.program_id(1)  # row-tile index (reduction axis, innermost)

    @pl.when(i == 0)
    def _():
        out_ref[...] = jnp.zeros_like(out_ref)

    x = x_ref[...]
    # Round + subtract in the input dtype (bf16-native on v6e/v7x); accumulate in f32.
    d = x - jnp.round(x)  # jnp.round == torch.round (half-to-even)
    if need_mask:
        # Tail block on the row axis: mask out-of-range rows with a select so
        # padded garbage (even NaN/Inf) cannot reach the sum.
        row = i * tile_rows + lax.broadcasted_iota(jnp.int32, x.shape, 1)
        d = jnp.where(row < num_rows, d, jnp.zeros_like(d))
    d32 = d.astype(jnp.float32)
    ssq = jnp.sum(d32 * d32, axis=(1, 2))        # (bt,) per-batch partial sum of squares
    out_ref[...] += ssq[None, :, None]           # broadcast across the 128 lanes


@functools.partial(jax.jit, static_argnames=("block_bytes",))
def integrality_loss(matrices: jax.Array, *, block_bytes: int = 4 * 1024 * 1024) -> jax.Array:
    """matrices: (B, M, N) float array -> scalar float32 loss."""
    B, M, N = matrices.shape
    dtype = matrices.dtype
    itemsize = jnp.dtype(dtype).itemsize
    sub = _sublanes_for(dtype)
    lane_n = _round_up(N, 128)

    def plane_bytes(rows: int) -> int:
        """Padded VMEM bytes of one (rows, N) plane (what the buffer really costs)."""
        return _round_up(rows, sub) * lane_n * itemsize

    # --- Tile selection (all math in padded layout bytes) --------------------
    if plane_bytes(M) <= block_bytes:
        # Whole matrix fits one block; fuse batches, but keep >= 2 parallel
        # grid steps whenever B >= 2 so both v7x TensorCores get work.
        tm, nm, need_mask = M, 1, False
        max_bt = max(1, block_bytes // plane_bytes(M))
        cap_bt = max_bt if B < 2 else min(max_bt, B // 2)
        bt = _largest_divisor_leq(B, cap_bt)
    else:
        # Tile the row (sublane) axis; N stays full so HBM DMAs stay contiguous.
        bt = 1
        tm = (block_bytes // (lane_n * itemsize)) // sub * sub
        tm = min(max(tm, sub), M)
        # TODO(synk): for pathologically wide N even `sub` rows may exceed the
        # budget; a lane-axis split would be needed there.
        nm = pl.cdiv(M, tm)
        need_mask = (nm * tm != M)
    nb = B // bt
    grid = (nb, nm)

    kernel = functools.partial(
        _integrality_kernel, num_rows=M, tile_rows=tm, need_mask=need_mask)

    cost = pl.CostEstimate(
        flops=3 * B * M * N,                       # sub + round + square-accumulate (approx)
        transcendentals=0,
        bytes_accessed=B * M * N * itemsize + nb * bt * 128 * 4,
    )

    sumsq = pl.pallas_call(
        kernel,
        out_shape=jax.ShapeDtypeStruct((nb, bt, 128), jnp.float32),
        grid_spec=pltpu.PrefetchScalarGridSpec(
            num_scalar_prefetch=0,
            grid=grid,
            in_specs=[pl.BlockSpec((bt, tm, N), lambda b, i: (b, i, 0))],
            out_specs=pl.BlockSpec((1, bt, 128), lambda b, i: (b, 0, 0)),
        ),
        compiler_params=pltpu.CompilerParams(
            dimension_semantics=("parallel", "arbitrary"),
            vmem_limit_bytes=32 * 1024 * 1024,
        ),
        cost_estimate=cost,
    )(matrices)

    # Cheap scalar tail in plain JAX: per-batch Frobenius norm, then mean over B.
    per_batch_sumsq = sumsq[:, :, 0].reshape(B)
    return jnp.mean(jnp.sqrt(per_batch_sumsq))


def _reference(matrices: jax.Array) -> jax.Array:
    d = (matrices - jnp.round(matrices)).astype(jnp.float32)
    norms = jnp.sqrt(jnp.sum(d * d, axis=(1, 2)))
    return jnp.mean(norms)


if __name__ == "__main__":
    key = jax.random.PRNGKey(0)
    keys = jax.random.split(key, 5)

    cases = [
        # (shape,            block_bytes)      # what it exercises
        ((2, 8, 8),          4 * 1024 * 1024),  # tiny batch-of-2 8x8 matrices (module's nominal use)
        ((4, 16, 128),       4 * 1024 * 1024),  # batch fusion + nb>=2 cap (bt=2, nb=2)
        ((2, 16, 64),        4 * 1024 * 1024),  # sub-128 lane dim (full-N contiguous DMA)
        ((3, 5, 37),         4 * 1024 * 1024),  # odd, non-(8,128)-aligned shape
        ((2, 300, 128),      64 * 1024),        # row tiling + masked tail block (grid=(2,3))
    ]

    for (shape, bb), k in zip(cases, keys):
        x = jax.random.normal(k, shape, dtype=jnp.float32) * 3.0
        loss = integrality_loss(x, block_bytes=bb)
        jax.block_until_ready(loss)
        ref = _reference(x)
        assert jnp.allclose(loss, ref, rtol=1e-5, atol=1e-5), (shape, loss, ref)

    print("KERNEL_OK")
</pallas_src>

<mosaic_0001>
module attributes {stable_mosaic.version = 11 : i64} {
  func.func @_integrality_kernel(%arg0: i32, %arg1: i32, %arg2: memref<1x8x8xf32, #tpu.memory_space<vmem>>, %arg3: memref<1x1x128xf32, #tpu.memory_space<vmem>>) attributes {dimension_semantics = [#tpu.dimension_semantics<parallel>, #tpu.dimension_semantics<arbitrary>], iteration_bounds = array<i64: 2, 1>, scalar_prefetch = 0 : i64, scratch_operands = 0 : i64, tpu.core_type = #tpu.core_type<tc>, window_params = [{transform_indices = @transform_0, window_bounds = array<i64: 1, 8, 8>}, {transform_indices = @transform_1, window_bounds = array<i64: 1, 1, 128>}]} {
    %c0_i32 = arith.constant 0 : i32
    %0 = arith.cmpi eq, %arg1, %c0_i32 : i32
    %1 = arith.extui %0 : i1 to i32
    %c0_i32_0 = arith.constant 0 : i32
    %2 = arith.cmpi ne, %1, %c0_i32_0 : i32
    scf.if %2 {
      %cst_9 = arith.constant 0.000000e+00 : f32
      %13 = vector.broadcast %cst_9 : f32 to vector<1x1x128xf32>
      %c0_10 = arith.constant 0 : index
      %c0_11 = arith.constant 0 : index
      %c0_12 = arith.constant 0 : index
      %14 = vector.load %arg3[%c0_10, %c0_11, %c0_12] : memref<1x1x128xf32, #tpu.memory_space<vmem>>, vector<1x1x128xf32>
      tpu.vector_store %arg3[%c0_10, %c0_11, %c0_12], %13 {strides = array<i32>} : memref<1x1x128xf32, #tpu.memory_space<vmem>>, vector<1x1x128xf32>,
    } else {
    }
    %c0 = arith.constant 0 : index
    %c0_1 = arith.constant 0 : index
    %c0_2 = arith.constant 0 : index
    %3 = vector.load %arg2[%c0, %c0_1, %c0_2] : memref<1x8x8xf32, #tpu.memory_space<vmem>>, vector<1x8x8xf32>
    %4 = math.roundeven %3 : vector<1x8x8xf32>
    %5 = arith.subf %3, %4 : vector<1x8x8xf32>
    %6 = arith.mulf %5, %5 : vector<1x8x8xf32>
    %cst = arith.constant dense<0.000000e+00> : vector<1xf32>
    %7 = vector.multi_reduction <add>, %6, %cst [1, 2] : vector<1x8x8xf32> to vector<1xf32>
    %c0_3 = arith.constant 0 : index
    %c0_4 = arith.constant 0 : index
    %c0_5 = arith.constant 0 : index
    %8 = vector.load %arg3[%c0_3, %c0_4, %c0_5] : memref<1x1x128xf32, #tpu.memory_space<vmem>>, vector<1x1x128xf32>
    %9 = vector.shape_cast %7 : vector<1xf32> to vector<1x1x1xf32>
    %10 = vector.broadcast %9 : vector<1x1x1xf32> to vector<1x1x128xf32>
    %11 = arith.addf %8, %10 : vector<1x1x128xf32>
    %c0_6 = arith.constant 0 : index
    %c0_7 = arith.constant 0 : index
    %c0_8 = arith.constant 0 : index
    %12 = vector.load %arg3[%c0_6, %c0_7, %c0_8] : memref<1x1x128xf32, #tpu.memory_space<vmem>>, vector<1x1x128xf32>
    tpu.vector_store %arg3[%c0_6, %c0_7, %c0_8], %11 {strides = array<i32>} : memref<1x1x128xf32, #tpu.memory_space<vmem>>, vector<1x1x128xf32>,
    return
  }
  func.func @transform_0(%arg0: i32, %arg1: i32) -> (i32, i32, i32) {
    %c0_i32 = arith.constant 0 : i32
    %c0_i32_0 = arith.constant 0 : i32
    return %arg0, %arg1, %c0_i32 : i32, i32, i32
  }
  func.func @transform_1(%arg0: i32, %arg1: i32) -> (i32, i32, i32) {
    %c0_i32 = arith.constant 0 : i32
    %c0_i32_0 = arith.constant 0 : i32
    %c0_i32_1 = arith.constant 0 : i32
    return %arg0, %c0_i32, %c0_i32_0 : i32, i32, i32
  }
}

</mosaic_0001>

<llo_original>
// kernel: integrality_loss.1
$region0: #{integrality_loss.1}
  #allocation0 [shape = 'u32[]', space=smem, size = 0x4, offset = 0x4, fixed_abs, tag = 'smem constant byte address 0x4 - core index']
  #allocation1 [shape = 'u32[144,128]{1,0:T(1,128)}', space=vmem, size = 0x12000, scoped, tag = 'internal scratch']
  %s0 = inlined_call_operand.hbm [shape: f32[2,8,8], index: 0, kind: input, shape index: {}]
  %s1 = inlined_call_operand.vmem [shape: f32[2,1,128], index: 1, kind: output, shape index: {}]
  %s2 = sld [smem:[#allocation0]]
  $region45: #{integrality_loss.1} parent=0
    _
  %s4 = ssub.s32 1, %s2
  %s5 = scalar_select 0, %s4, %s2
  $region1: #{integrality_loss.1} parent=0
    #allocation2 [shape = 'u8[8192]{0}', space=vmem, size = 0x2000, scoped, tag = 'input window, operand 0']
    #allocation3 [shape = 's32[2]{0}', space=sflag, size = 0x8, scoped, tag = 'scoped memory for integrality_loss.1']
    %6 = vsyncpa [#allocation3], 0
    %s7 = scalar_lea.sflag [#allocation3], 1
    %8 = vsyncpa %s7, 0
    loop: start=0, step=1, limit=4
    $region2: #{integrality_loss.1} parent=1 // loop_pre_header
      _
    $region3: #{integrality_loss.1} parent=1 // loop_header
      %s10 = sphi 0, %s14
      %p11 = scmp.ge.s32.totalorder %s10, 4
      %s17 = sphi 0, %s29
      %s18 = sphi 0, %s25
      %s19 = sphi 0, %s17
      %s20 = sphi 0, %s18
      %s21 = sphi 0, %s19
      %s22 = sphi 0, %s20
      %s34 = sphi 0, %s36
      %s37 = sphi 0, %s34
      %s38 = sphi 0, %s37
      %s54 = sphi 0, %s38
      %s60 = sphi 0, %s62
      %s63 = sphi 0, %s60
      %s64 = sphi 0, %s63
      %s80 = sphi 0, %s64
    $region4: #{integrality_loss.1} parent=1 // loop_header_branch
      %13 = sbr.rel (%p11) target = $region8
    $region5: #{integrality_loss.1} parent=1 // loop_body
      %s15 = ssub.s32 %s10, 1
      %s16 = ssub.s32 %s10, 2
      %s23 = sadd.s32 1, %s18
      %p24 = scmp.ge.s32.totalorder %s23, 1
      %s25 = scalar_select %p24, 0, %s23
      %s26 = sadd.s32 1, %s17
      %s27 = scalar_select %p24, %s26, %s17
      %p28 = scmp.ge.s32.totalorder %s27, 2
      %s29 = scalar_select %p28, 0, %s27
      %s30 = ssub.s32 %s17, %s29
      %s31 = ssub.s32 %s18, %s25
      %s32 = sor.u32 %s30, %s31
      %p33 = scmp.eq.s32.totalorder %s32, 0
      %s35 = sadd.s32 %s34, 1
      %s36 = scalar_select %p33, %s34, %s35
      %p39 = pneg %p33
      %p40 = scmp.eq.s32.totalorder %s10, 1
      %p41 = por %p39, %p40
      %p42 = scmp.ne.s32.totalorder %s34, %s37
      %p43 = scmp.eq.s32.totalorder %s10, 0
      %p44 = por %p42, %p43
      %p45 = scmp.ne.s32.totalorder %s34, %s37
      %p46 = scmp.eq.s32.totalorder %s15, 1
      %p47 = por %p45, %p46
      %p48 = scmp.ne.s32.totalorder %s37, %s38
      %p49 = scmp.eq.s32.totalorder %s15, 0
      %p50 = por %p48, %p49
      %p51 = scmp.ne.s32.totalorder %s37, %s38
      %p52 = scmp.eq.s32.totalorder %s16, 1
      %p53 = por %p51, %p52
      %p55 = scmp.ne.s32.totalorder %s38, %s54
      %p56 = scmp.eq.s32.totalorder %s16, 0
      %p57 = por %p55, %p56
      %s58 = ssub.s32 %s17, %s29
      %p59 = scmp.eq.s32.totalorder %s58, 0
      %s61 = sadd.s32 %s60, 1
      %s62 = scalar_select %p59, %s60, %s61
      %p65 = pneg %p59
      %p66 = scmp.eq.s32.totalorder %s10, 1
      %p67 = por %p65, %p66
      %p68 = scmp.ne.s32.totalorder %s60, %s63
      %p69 = scmp.eq.s32.totalorder %s10, 0
      %p70 = por %p68, %p69
      %p71 = scmp.ne.s32.totalorder %s60, %s63
      %p72 = scmp.eq.s32.totalorder %s15, 1
      %p73 = por %p71, %p72
      %p74 = scmp.ne.s32.totalorder %s63, %s64
      %p75 = scmp.eq.s32.totalorder %s15, 0
      %p76 = por %p74, %p75
      %p77 = scmp.ne.s32.totalorder %s63, %s64
      %p78 = scmp.eq.s32.totalorder %s16, 1
      %p79 = por %p77, %p78
      %p81 = scmp.ne.s32.totalorder %s64, %s80
      %p82 = scmp.eq.s32.totalorder %s16, 0
      %p83 = por %p81, %p82
      %p84 = scmp.le.s32.totalorder 1, %s10
      %p85 = scmp.lt.s32.totalorder %s10, 3
      %p86 = pnand %p84, %p85
      %p87 = pneg %p86
      // Predicated region
      $region9: #{integrality_loss.1} parent=5 // pred_check
        _
      $region10: #{integrality_loss.1} parent=5 // pred_check_branch
        %89 = sbr.rel (%p86) target = $region12
      $region11: #{integrality_loss.1} parent=5 // pred_region
        %s90 = ssub.s32 %s10, 1
      $region12: #{integrality_loss.1} parent=5 // pred_fallthru
        _
      %p91 = scmp.lt.s32.totalorder %s10, 2
      // Predicated region
      $region13: #{integrality_loss.1} parent=5 // pred_check
        %p92 = pneg %p91
      $region14: #{integrality_loss.1} parent=5 // pred_check_branch
        %94 = sbr.rel (%p92) target = $region16
      $region15: #{integrality_loss.1} parent=5 // pred_region
        // Predicated region
        $region17: #{integrality_loss.1} parent=15 // pred_check
          %p95 = pneg %p44
        $region18: #{integrality_loss.1} parent=15 // pred_check_branch
          %97 = sbr.rel (%p95) target = $region20
        $region19: #{integrality_loss.1} parent=15 // pred_region
          %s98 = sand.u32 %s34, 1
          %s99 = scalar_lea.sflag [#allocation3], %s98
          %s100 = sand.u32 %s34, 1
          %s101 = smul.addr %s100, 8
          %s102 = scalar_lea.vmem [#allocation2], %s101
          %s104 = ssub.s32 128, 128
          %105 = vsyncadd %s99, %s104
          %s106 = sadd.s32 %s18, %s17
          %s107 = smul.addr %s106, 128
          %s108 = scalar_lea.hbm %s0, %s107
          %s110 = sshll.u32 %s102, 4
          %s111 = int_to_ptr.vmem [resolvable:$true] %s110
          %113 = dma.hbm_to_vmem [thread:$0]  %s108, 128, %s111, %s99
        $region20: #{integrality_loss.1} parent=15 // pred_fallthru
          _
      $region16: #{integrality_loss.1} parent=5 // pred_fallthru
        _
      %p114 = scmp.le.s32.totalorder 1, %s10
      %p115 = scmp.lt.s32.totalorder %s10, 3
      %p116 = pnand %p114, %p115
      %p117 = pneg %p116
      // Predicated region
      $region21: #{integrality_loss.1} parent=5 // pred_check
        _
      $region22: #{integrality_loss.1} parent=5 // pred_check_branch
        %119 = sbr.rel (%p116) target = $region24
      $region23: #{integrality_loss.1} parent=5 // pred_region
        %s120 = ssub.s32 %s10, 1
        %s121 = sand.u32 %s37, 1
        %s122 = scalar_lea.sflag [#allocation3], %s121
        %s123 = sand.u32 %s37, 1
        %s124 = smul.addr %s123, 8
        %s125 = scalar_lea.vmem [#allocation2], %s124
        // Predicated region
        $region25: #{integrality_loss.1} parent=23 // pred_check
          %p126 = pneg %p50
        $region26: #{integrality_loss.1} parent=23 // pred_check_branch
          %128 = sbr.rel (%p126) target = $region28
        $region27: #{integrality_loss.1} parent=23 // pred_region
          %129 = dma.done %s122, 128
        $region28: #{integrality_loss.1} parent=23 // pred_fallthru
          _
        %s130 = sand.u32 %s37, 1
        %s131 = scalar_lea.sflag [#allocation3], %s130
        %s132 = sand.u32 %s37, 1
        %s133 = smul.addr %s132, 8
        %s134 = scalar_lea.vmem [#allocation2], %s133
        %p135 = pneg %p50
        %p136 = pneg %p47
        %p137 = pneg %p76
        %p138 = pneg %p73
        %p139 = scmp.lt.s32.totalorder %s19, 1
        %s140 = scalar_select %p139, %s19, 1
        %s141 = scalar_lea.vmem %s1, %s140
        %p142 = scmp.lt.s32.totalorder %s19, 1
        %s143 = scalar_select %p142, %s19, 1
        %s144 = scalar_lea.vmem %s1, %s143
        %p145 = scmp.eq.s32.totalorder %s20, 0
        // Predicated region
        $region29: #{integrality_loss.1} parent=23 // pred_check
          %p146 = pneg %p145
        $region30: #{integrality_loss.1} parent=23 // pred_check_branch
          %148 = sbr.rel (%p146) target = $region32
        $region31: #{integrality_loss.1} parent=23 // pred_region
          %149 = vst [vmem:[%s144] sm:$0x1] 0.0
        $region32: #{integrality_loss.1} parent=23 // pred_fallthru
          _
        %v150 = vld [vmem:[%s125] sm:$0xff]
        %v151 = vround.ne.pseudo %v150
        %v152 = vsub.f32 %v150, %v151
        %v153 = vmul.f32 %v152, %v152
        %vm154 = vcmask 64512
        %v155 = vsel %vm154, %v153, 0.0
        %156 = vadd.xlane.f32.xlu0 %v155
        %v157 = vpop.xlane.xlu0 %156
        %v158 = vrot.slane %v157, 4
        %v159 = vadd.f32 %v157, %v158
        %v160 = vrot.slane %v159, 2
        %v161 = vadd.f32 %v159, %v160
        %v162 = vrot.slane %v161, 1
        %v163 = vadd.f32 %v161, %v162
        %v164 = vld [vmem:[%s144] sm:$0x1]
        %v165 = vadd.f32 %v164, %v163
        %166 = vst [vmem:[%s144] sm:$0x1] %v165
        %p167 = scmp.lt.s32.totalorder %s19, 1
        %s168 = scalar_select %p167, %s19, 1
        %s169 = scalar_lea.vmem %s1, %s168
        // Predicated region
        $region33: #{integrality_loss.1} parent=23 // pred_check
          %p170 = pneg %p73
        $region34: #{integrality_loss.1} parent=23 // pred_check_branch
          %172 = sbr.rel (%p170) target = $region36
        $region35: #{integrality_loss.1} parent=23 // pred_region
          _
        $region36: #{integrality_loss.1} parent=23 // pred_fallthru
          _
      $region24: #{integrality_loss.1} parent=5 // pred_fallthru
        _
      %p173 = scmp.le.s32.totalorder 2, %s10
      // Predicated region
      $region37: #{integrality_loss.1} parent=5 // pred_check
        %p174 = pneg %p173
      $region38: #{integrality_loss.1} parent=5 // pred_check_branch
        %176 = sbr.rel (%p174) target = $region40
      $region39: #{integrality_loss.1} parent=5 // pred_region
        %s177 = ssub.s32 %s10, 2
        // Predicated region
        $region41: #{integrality_loss.1} parent=39 // pred_check
          %p178 = pneg %p79
        $region42: #{integrality_loss.1} parent=39 // pred_check_branch
          %180 = sbr.rel (%p178) target = $region44
        $region43: #{integrality_loss.1} parent=39 // pred_region
          %p181 = scmp.lt.s32.totalorder %s21, 1
          %s182 = scalar_select %p181, %s21, 1
          %s183 = scalar_lea.vmem %s1, %s182
        $region44: #{integrality_loss.1} parent=39 // pred_fallthru
          _
      $region40: #{integrality_loss.1} parent=5 // pred_fallthru
        _
    $region6: #{integrality_loss.1} parent=1 // loop_footer
      %s14 = sadd.s32 1, %s10
    $region7: #{integrality_loss.1} parent=1 // loop_footer_branch
      %9 = sbr.rel target = $region3
    $region8: #{integrality_loss.1} parent=1 // loop_exit
      _
    %184 = vsyncpa [#allocation3], 1
    %s185 = scalar_lea.sflag [#allocation3], 1
    %186 = vsyncpa %s185, 1

</llo_original>
